<compile_context>
chip_gen: v7x
topology: tpu7x:2x2x1
jax: 0.10.0
libtpu: 0.0.40
codegen_flags: <defaults>
</compile_context>

<pallas_src>
import jax
import jax.numpy as jnp
from jax.experimental import pallas as pl
from jax.experimental.pallas import tpu as pltpu

HIDDEN = 32
NUM_ACTIONS = 3
WIDE = 128          # padded fused hidden / output width (full 128-lane vregs)
BIAS_ROWS = 16      # bias block appended to the weight slab (rows 0..2 live), tile-aligned
ALIGN = 16          # row alignment of slab sections (safe for f32 and bf16 tiling)


def _round_up(n, m):
    return -(-n // m) * m


def _dueling_kernel(x_ref, w_ref, out_ref):
    dp = x_ref.shape[1]          # padded feature dim (multiple of 16)
    cdt = w_ref.dtype            # compute dtype (f32 or bf16), accumulation is f32

    x = x_ref[...]               # (TB, dp)

    # Static, tile-aligned slices of the packed weight slab (zero-cost views).
    w1 = w_ref[0:dp, :]                                  # (dp, 128)  [aw1 | vw1 | 0]
    w2 = w_ref[dp:dp + WIDE, :]                          # (128, 128) blockdiag(aw2, vw2)
    w3 = w_ref[dp + WIDE:dp + 2 * WIDE, :]               # (128, 128) combine folded in
    b = w_ref[dp + 2 * WIDE:dp + 2 * WIDE + BIAS_ROWS, :].astype(jnp.float32)
    b1 = b[0:1, :]
    b2 = b[1:2, :]
    b3 = b[2:3, :]

    h = jnp.maximum(jnp.dot(x, w1, preferred_element_type=jnp.float32) + b1, 0.0).astype(cdt)
    h = jnp.maximum(jnp.dot(h, w2, preferred_element_type=jnp.float32) + b2, 0.0).astype(cdt)
    q = jnp.dot(h, w3, preferred_element_type=jnp.float32) + b3      # (TB, 128), cols 0..2 live
    out_ref[...] = q.astype(out_ref.dtype)


def pack_params(p, dtype=jnp.bfloat16):
    """Pack all 12 per-layer arrays into ONE weight slab (biases merged as rows).

    Slab rows: [W1 (d_pad) | W2 (128) | W3' (128, dueling combine folded) | bias (16)],
    128 columns.  All section starts are 16-row aligned.
    """
    D = p["aw1"].shape[0]
    d_pad = _round_up(D, ALIGN)

    # Layer 1: [aw1 | vw1 | 0], rows zero-padded to d_pad (x is zero-padded to match).
    w1 = jnp.zeros((d_pad, WIDE), jnp.float32)
    w1 = w1.at[:D, 0:HIDDEN].set(p["aw1"])
    w1 = w1.at[:D, HIDDEN:2 * HIDDEN].set(p["vw1"])

    # Layer 2: blockdiag(aw2, vw2), zero-padded to 128x128.
    w2 = jnp.zeros((WIDE, WIDE), jnp.float32)
    w2 = w2.at[0:HIDDEN, 0:HIDDEN].set(p["aw2"])
    w2 = w2.at[HIDDEN:2 * HIDDEN, HIDDEN:2 * HIDDEN].set(p["vw2"])

    # Layer 3 with the dueling combine folded in at pack time:
    #   q_k = h_adv @ (aw3[:,k] - mean_j aw3[:,j]) + h_val @ vw3 + (ab3_k - mean(ab3) + vb3)
    aw3c = p["aw3"] - jnp.mean(p["aw3"], axis=1, keepdims=True)          # (32, 3)
    vw3b = jnp.broadcast_to(p["vw3"], (HIDDEN, NUM_ACTIONS))             # (32, 3)
    w3 = jnp.zeros((WIDE, WIDE), jnp.float32)
    w3 = w3.at[0:HIDDEN, 0:NUM_ACTIONS].set(aw3c)
    w3 = w3.at[HIDDEN:2 * HIDDEN, 0:NUM_ACTIONS].set(vw3b)

    # Bias rows (row 0 = layer1, row 1 = layer2, row 2 = combined layer3).
    b = jnp.zeros((BIAS_ROWS, WIDE), jnp.float32)
    b = b.at[0, 0:HIDDEN].set(p["ab1"][0])
    b = b.at[0, HIDDEN:2 * HIDDEN].set(p["vb1"][0])
    b = b.at[1, 0:HIDDEN].set(p["ab2"][0])
    b = b.at[1, HIDDEN:2 * HIDDEN].set(p["vb2"][0])
    b3c = p["ab3"][0] - jnp.mean(p["ab3"]) + p["vb3"][0, 0]
    b = b.at[2, 0:NUM_ACTIONS].set(b3c)

    return jnp.concatenate([w1, w2, w3, b], axis=0).astype(dtype)


def dueling_dqn_forward(x, w_slab, tile_b=None):
    """x: (B, D) already flattened; w_slab from pack_params.  Returns (B, NUM_ACTIONS) f32."""
    B, D = x.shape
    d_pad = _round_up(D, ALIGN)
    wrows = w_slab.shape[0]
    assert wrows == d_pad + 2 * WIDE + BIAS_ROWS, "slab does not match input feature dim"

    x = x.astype(w_slab.dtype)
    if d_pad != D:
        x = jnp.pad(x, ((0, 0), (0, d_pad - D)))

    # Tile heuristic: per-step overhead (~0.35us) dominates this tiny net, so prefer
    # one big tile; but for large B keep >=2 grid steps so both v7x TensorCores work.
    if tile_b is None:
        tile_b = B
        for cand in (8192, 4096, 2048, 1024, 512, 256):
            if B % cand == 0 and B // cand >= 2:
                tile_b = cand
                break
    if B % tile_b != 0:
        tile_b = B
    grid = (B // tile_b,)

    itemsize = jnp.dtype(w_slab.dtype).itemsize
    flops = 2 * B * (d_pad + 2 * WIDE) * WIDE
    bytes_accessed = itemsize * (B * d_pad + wrows * WIDE) + 4 * B * WIDE

    q_pad = pl.pallas_call(
        _dueling_kernel,
        out_shape=jax.ShapeDtypeStruct((B, WIDE), jnp.float32),
        grid=grid,
        in_specs=[
            pl.BlockSpec((tile_b, d_pad), lambda i: (i, 0)),     # x: tiled over batch
            pl.BlockSpec((wrows, WIDE), lambda i: (0, 0)),       # packed weights: resident
        ],
        out_specs=pl.BlockSpec((tile_b, WIDE), lambda i: (i, 0)),  # lane-dense (128) output
        compiler_params=pltpu.CompilerParams(
            dimension_semantics=("parallel",)),
        cost_estimate=pl.CostEstimate(
            flops=flops, transcendentals=0, bytes_accessed=bytes_accessed),
    )(x, w_slab)
    return q_pad[:, :NUM_ACTIONS]


def init_params(key, in_dim):
    """Deterministic synthetic init (uniform, torch-Linear-like scale), (in, out) layout."""
    def linear(k, fan_in, fan_out):
        k1, k2 = jax.random.split(k)
        bound = 1.0 / jnp.sqrt(jnp.float32(fan_in))
        w = jax.random.uniform(k1, (fan_in, fan_out), jnp.float32, -bound, bound)
        b = jax.random.uniform(k2, (1, fan_out), jnp.float32, -bound, bound)
        return w, b

    keys = jax.random.split(key, 6)
    aw1, ab1 = linear(keys[0], in_dim, HIDDEN)
    aw2, ab2 = linear(keys[1], HIDDEN, HIDDEN)
    aw3, ab3 = linear(keys[2], HIDDEN, NUM_ACTIONS)
    vw1, vb1 = linear(keys[3], in_dim, HIDDEN)
    vw2, vb2 = linear(keys[4], HIDDEN, HIDDEN)
    vw3, vb3 = linear(keys[5], HIDDEN, 1)
    return dict(aw1=aw1, ab1=ab1, aw2=aw2, ab2=ab2, aw3=aw3, ab3=ab3,
                vw1=vw1, vb1=vb1, vw2=vw2, vb2=vb2, vw3=vw3, vb3=vb3)


def dueling_dqn_ref(x, p):
    """Pure-JAX reference mirroring the PyTorch forward."""
    def mlp(w1, b1, w2, b2, w3, b3):
        h = jnp.maximum(x @ w1 + b1, 0.0)
        h = jnp.maximum(h @ w2 + b2, 0.0)
        return h @ w3 + b3

    adv = mlp(p["aw1"], p["ab1"], p["aw2"], p["ab2"], p["aw3"], p["ab3"])
    val = mlp(p["vw1"], p["vb1"], p["vw2"], p["vb2"], p["vw3"], p["vb3"])
    return val + adv - adv.mean(axis=1, keepdims=True)


if __name__ == "__main__":
    key = jax.random.PRNGKey(0)
    k_x, k_p, k_x2 = jax.random.split(key, 3)

    # Small shape matching the module: env.get_status()[0].shape == (8,), batch=2.
    B, D = 2, 8
    x = jax.random.normal(k_x, (B, D), jnp.float32)
    params = init_params(k_p, D)

    # f32 path: tight correctness check against the pure-JAX reference.
    w_slab_f32 = pack_params(params, dtype=jnp.float32)
    out = jax.block_until_ready(dueling_dqn_forward(x, w_slab_f32))
    ref = dueling_dqn_ref(x, params)
    assert out.shape == (B, NUM_ACTIONS)
    assert jnp.allclose(out, ref, atol=1e-4, rtol=1e-4), (out, ref)

    # Batched/tiled f32 path (grid > 1, weights resident).
    B2 = 256
    x2 = jax.random.normal(k_x2, (B2, D), jnp.float32)
    out2 = jax.block_until_ready(dueling_dqn_forward(x2, w_slab_f32, tile_b=128))
    ref2 = dueling_dqn_ref(x2, params)
    assert out2.shape == (B2, NUM_ACTIONS)
    assert jnp.allclose(out2, ref2, atol=1e-4, rtol=1e-4)

    # bf16 operands (v6e/v7x-native MXU), f32 accumulation; loose tolerance.
    w_slab_bf16 = pack_params(params, dtype=jnp.bfloat16)
    out3 = jax.block_until_ready(dueling_dqn_forward(x2, w_slab_bf16, tile_b=128))
    assert out3.shape == (B2, NUM_ACTIONS)
    assert jnp.allclose(out3, ref2, atol=1e-1, rtol=1e-1)

    print("KERNEL_OK")
</pallas_src>

<mosaic_0001>
module attributes {stable_mosaic.version = 11 : i64} {
  func.func @_dueling_kernel(%arg0: i32, %arg1: memref<2x16xf32, #tpu.memory_space<vmem>>, %arg2: memref<288x128xf32, #tpu.memory_space<vmem>>, %arg3: memref<2x128xf32, #tpu.memory_space<vmem>>) attributes {dimension_semantics = [#tpu.dimension_semantics<parallel>], iteration_bounds = array<i64: 1>, scalar_prefetch = 0 : i64, scratch_operands = 0 : i64, tpu.core_type = #tpu.core_type<tc>, window_params = [{transform_indices = @transform_0, window_bounds = array<i64: 2, 16>}, {pipeline_mode = #tpu.pipeline_mode<synchronous>, transform_indices = @transform_1, window_bounds = array<i64: 288, 128>}, {transform_indices = @transform_2, window_bounds = array<i64: 2, 128>}]} {
    %c0 = arith.constant 0 : index
    %c0_0 = arith.constant 0 : index
    %0 = vector.load %arg1[%c0, %c0_0] : memref<2x16xf32, #tpu.memory_space<vmem>>, vector<2x16xf32>
    %c0_1 = arith.constant 0 : index
    %c0_2 = arith.constant 0 : index
    %1 = vector.load %arg2[%c0_1, %c0_2] : memref<288x128xf32, #tpu.memory_space<vmem>>, vector<16x128xf32>
    %c16 = arith.constant 16 : index
    %c0_3 = arith.constant 0 : index
    %2 = vector.load %arg2[%c16, %c0_3] : memref<288x128xf32, #tpu.memory_space<vmem>>, vector<128x128xf32>
    %c144 = arith.constant 144 : index
    %c0_4 = arith.constant 0 : index
    %3 = vector.load %arg2[%c144, %c0_4] : memref<288x128xf32, #tpu.memory_space<vmem>>, vector<128x128xf32>
    %c272 = arith.constant 272 : index
    %c0_5 = arith.constant 0 : index
    %4 = vector.load %arg2[%c272, %c0_5] : memref<288x128xf32, #tpu.memory_space<vmem>>, vector<16x128xf32>
    %5 = vector.extract_strided_slice %4 {offsets = [0, 0], sizes = [1, 128], strides = [1, 1]} : vector<16x128xf32> to vector<1x128xf32>
    %6 = vector.extract_strided_slice %4 {offsets = [1, 0], sizes = [1, 128], strides = [1, 1]} : vector<16x128xf32> to vector<1x128xf32>
    %7 = vector.extract_strided_slice %4 {offsets = [2, 0], sizes = [1, 128], strides = [1, 1]} : vector<16x128xf32> to vector<1x128xf32>
    %cst = arith.constant dense<0.000000e+00> : vector<2x128xf32>
    %8 = tpu.matmul %0, %1, %cst {dimension_numbers = #tpu.dot_dimension_numbers<[1], [0], [0], [1], [0, 0, 1, 1], [], []>} : vector<2x16xf32>, vector<16x128xf32>, vector<2x128xf32> -> vector<2x128xf32>
    %9 = vector.broadcast %5 : vector<1x128xf32> to vector<2x128xf32>
    %10 = arith.addf %8, %9 : vector<2x128xf32>
    %cst_6 = arith.constant 0.000000e+00 : f32
    %11 = vector.broadcast %cst_6 : f32 to vector<2x128xf32>
    %12 = arith.maximumf %10, %11 : vector<2x128xf32>
    %cst_7 = arith.constant dense<0.000000e+00> : vector<2x128xf32>
    %13 = tpu.matmul %12, %2, %cst_7 {dimension_numbers = #tpu.dot_dimension_numbers<[1], [0], [0], [1], [0, 0, 1, 1], [], []>} : vector<2x128xf32>, vector<128x128xf32>, vector<2x128xf32> -> vector<2x128xf32>
    %14 = vector.broadcast %6 : vector<1x128xf32> to vector<2x128xf32>
    %15 = arith.addf %13, %14 : vector<2x128xf32>
    %cst_8 = arith.constant 0.000000e+00 : f32
    %16 = vector.broadcast %cst_8 : f32 to vector<2x128xf32>
    %17 = arith.maximumf %15, %16 : vector<2x128xf32>
    %cst_9 = arith.constant dense<0.000000e+00> : vector<2x128xf32>
    %18 = tpu.matmul %17, %3, %cst_9 {dimension_numbers = #tpu.dot_dimension_numbers<[1], [0], [0], [1], [0, 0, 1, 1], [], []>} : vector<2x128xf32>, vector<128x128xf32>, vector<2x128xf32> -> vector<2x128xf32>
    %19 = vector.broadcast %7 : vector<1x128xf32> to vector<2x128xf32>
    %20 = arith.addf %18, %19 : vector<2x128xf32>
    %c0_10 = arith.constant 0 : index
    %c0_11 = arith.constant 0 : index
    %21 = vector.load %arg3[%c0_10, %c0_11] : memref<2x128xf32, #tpu.memory_space<vmem>>, vector<2x128xf32>
    tpu.vector_store %arg3[%c0_10, %c0_11], %20 {strides = array<i32>} : memref<2x128xf32, #tpu.memory_space<vmem>>, vector<2x128xf32>,
    return
  }
  func.func @transform_0(%arg0: i32) -> (i32, i32) {
    %c0_i32 = arith.constant 0 : i32
    %c0_i32_0 = arith.constant 0 : i32
    return %arg0, %c0_i32 : i32, i32
  }
  func.func @transform_1(%arg0: i32) -> (i32, i32) {
    %c0_i32 = arith.constant 0 : i32
    %c0_i32_0 = arith.constant 0 : i32
    %c0_i32_1 = arith.constant 0 : i32
    return %c0_i32, %c0_i32_0 : i32, i32
  }
  func.func @transform_2(%arg0: i32) -> (i32, i32) {
    %c0_i32 = arith.constant 0 : i32
    %c0_i32_0 = arith.constant 0 : i32
    return %arg0, %c0_i32 : i32, i32
  }
}

</mosaic_0001>

<llo_original>
// kernel: tpu_custom_call.1
$region0: #{tpu_custom_call.1}
  #allocation0 [shape = 'u32[]', space=smem, size = 0x4, offset = 0x4, fixed_abs, tag = 'smem constant byte address 0x4 - core index']
  #allocation1 [shape = 'u32[144,128]{1,0:T(1,128)}', space=vmem, size = 0x12000, scoped, tag = 'internal scratch']
  %s0 = inlined_call_operand.hbm [shape: f32[2,16], index: 0, kind: input, shape index: {}]
  %s1 = inlined_call_operand.hbm [shape: f32[288,128], index: 1, kind: input, shape index: {}]
  %s2 = inlined_call_operand.hbm [shape: f32[2,128], index: 2, kind: output, shape index: {}]
  %s3 = sld [smem:[#allocation0]]
  $region26: #{tpu_custom_call.1} parent=0
    _
  %s5 = ssub.s32 1, %s3
  %s6 = scalar_select 0, %s5, %s3
  $region1: #{tpu_custom_call.1} parent=0
    #allocation2 [shape = 'u8[1024]{0}', space=vmem, size = 0x400, scoped, tag = 'input window, operand 0, single buffered']
    #allocation3 [shape = 's32[1]{0}', space=sflag, size = 0x4, scoped, tag = 'scoped memory for tpu_custom_call.1']
    #allocation4 [shape = 's32[1]{0}', space=sflag, size = 0x4, scoped, tag = 'scoped memory for tpu_custom_call.1']
    #allocation5 [shape = 'u8[147456]{0}', space=vmem, size = 0x24000, scoped, tag = 'input window, operand 1, single buffered']
    #allocation6 [shape = 's32[1]{0}', space=sflag, size = 0x4, scoped, tag = 'scoped memory for tpu_custom_call.1']
    #allocation7 [shape = 'u8[1024]{0}', space=vmem, size = 0x400, scoped, tag = 'output window, operand 0, single buffered']
    %7 = vsyncpa [#allocation3], 0
    %8 = vsyncpa [#allocation6], 0
    %9 = vsyncpa [#allocation4], 0
    // Predicated region
    $region2: #{tpu_custom_call.1} parent=1 // pred_check
      _
    $region3: #{tpu_custom_call.1} parent=1 // pred_check_branch
      %11 = sbr.rel (0) target = $region5
    $region4: #{tpu_custom_call.1} parent=1 // pred_region
      %s13 = ssub.s32 32, 32
      %14 = vsyncadd [#allocation3], %s13
      %s16 = sshll.u32 [#allocation2], 4
      %s17 = int_to_ptr.vmem [resolvable:$true] %s16
      %19 = dma.hbm_to_vmem [thread:$0]  %s0, 32, %s17, [#allocation3]
    $region5: #{tpu_custom_call.1} parent=1 // pred_fallthru
      _
    // Predicated region
    $region6: #{tpu_custom_call.1} parent=1 // pred_check
      _
    $region7: #{tpu_custom_call.1} parent=1 // pred_check_branch
      %21 = sbr.rel (0) target = $region9
    $region8: #{tpu_custom_call.1} parent=1 // pred_region
      %s23 = ssub.s32 4608, 4608
      %24 = vsyncadd [#allocation6], %s23
      %s25 = sshll.u32 [#allocation5], 4
      %s26 = int_to_ptr.vmem [resolvable:$true] %s25
      %31 = dma.hbm_to_vmem [thread:$0]  %s1, 4608, %s26, [#allocation6], 128, 128, 8
    $region9: #{tpu_custom_call.1} parent=1 // pred_fallthru
      _
    // Predicated region
    $region10: #{tpu_custom_call.1} parent=1 // pred_check
      _
    $region11: #{tpu_custom_call.1} parent=1 // pred_check_branch
      %33 = sbr.rel (0) target = $region13
    $region12: #{tpu_custom_call.1} parent=1 // pred_region
      %34 = dma.done [#allocation3], 32
    $region13: #{tpu_custom_call.1} parent=1 // pred_fallthru
      _
    // Predicated region
    $region14: #{tpu_custom_call.1} parent=1 // pred_check
      _
    $region15: #{tpu_custom_call.1} parent=1 // pred_check_branch
      %36 = sbr.rel (0) target = $region17
    $region16: #{tpu_custom_call.1} parent=1 // pred_region
      %37 = dma.done [#allocation6], 4608
    $region17: #{tpu_custom_call.1} parent=1 // pred_fallthru
      _
    %v38 = vld [vmem:[#allocation2] sm:$0x3]
    %v39 = vld [vmem:[#allocation5] sm:$0xff]
    %v40 = vld [vmem:[#allocation5 + $0x8] sm:$0xff]
    %v41 = vld [vmem:[#allocation5 + $0x10] sm:$0xff]
    %v42 = vld [vmem:[#allocation5 + $0x18] sm:$0xff]
    %v43 = vld [vmem:[#allocation5 + $0x20] sm:$0xff]
    %v44 = vld [vmem:[#allocation5 + $0x28] sm:$0xff]
    %v45 = vld [vmem:[#allocation5 + $0x30] sm:$0xff]
    %v46 = vld [vmem:[#allocation5 + $0x38] sm:$0xff]
    %v47 = vld [vmem:[#allocation5 + $0x40] sm:$0xff]
    %v48 = vld [vmem:[#allocation5 + $0x48] sm:$0xff]
    %v49 = vld [vmem:[#allocation5 + $0x50] sm:$0xff]
    %v50 = vld [vmem:[#allocation5 + $0x58] sm:$0xff]
    %v51 = vld [vmem:[#allocation5 + $0x60] sm:$0xff]
    %v52 = vld [vmem:[#allocation5 + $0x68] sm:$0xff]
    %v53 = vld [vmem:[#allocation5 + $0x70] sm:$0xff]
    %v54 = vld [vmem:[#allocation5 + $0x78] sm:$0xff]
    %v55 = vld [vmem:[#allocation5 + $0x80] sm:$0xff]
    %v56 = vld [vmem:[#allocation5 + $0x88] sm:$0xff]
    %v57 = vld [vmem:[#allocation5 + $0x90] sm:$0xff]
    %v58 = vld [vmem:[#allocation5 + $0x98] sm:$0xff]
    %v59 = vld [vmem:[#allocation5 + $0xa0] sm:$0xff]
    %v60 = vld [vmem:[#allocation5 + $0xa8] sm:$0xff]
    %v61 = vld [vmem:[#allocation5 + $0xb0] sm:$0xff]
    %v62 = vld [vmem:[#allocation5 + $0xb8] sm:$0xff]
    %v63 = vld [vmem:[#allocation5 + $0xc0] sm:$0xff]
    %v64 = vld [vmem:[#allocation5 + $0xc8] sm:$0xff]
    %v65 = vld [vmem:[#allocation5 + $0xd0] sm:$0xff]
    %v66 = vld [vmem:[#allocation5 + $0xd8] sm:$0xff]
    %v67 = vld [vmem:[#allocation5 + $0xe0] sm:$0xff]
    %v68 = vld [vmem:[#allocation5 + $0xe8] sm:$0xff]
    %v69 = vld [vmem:[#allocation5 + $0xf0] sm:$0xff]
    %v70 = vld [vmem:[#allocation5 + $0xf8] sm:$0xff]
    %v71 = vld [vmem:[#allocation5 + $0x100] sm:$0xff]
    %v72 = vld [vmem:[#allocation5 + $0x108] sm:$0xff]
    %v73 = vld [vmem:[#allocation5 + $0x110] sm:$0xff]
    %v74 = vlaneseq
    %v75 = vshrl.u32 %v74, 7
    %v76 = vsub.s32 0, %v75
    %v77 = vrot.slane %v73, %v76
    %vm78 = vcmask 130048
    %v80 = vsel %vm78, %v38, 0
    %82 = vmatprep.subr.mxu0 0.0
    %83 = vmatpush1.msra.mxu0 %v39
    %84 = vmatprep.subr.mxu0 0.0
    %85 = vmatpush1.msra.mxu0 %v40
    %86 = vmatprep.subr.mxu0 0.0
    %87 = vmatpush1.msra.mxu0 0.0
    %88 = vmatprep.subr.mxu0 0.0
    %89 = vmatpush1.msra.mxu0 0.0
    %90 = vmatprep.subr.mxu0 0.0
    %91 = vmatpush1.msra.mxu0 0.0
    %92 = vmatprep.subr.mxu0 0.0
    %93 = vmatpush1.msra.mxu0 0.0
    %94 = vmatprep.subr.mxu0 0.0
    %95 = vmatpush1.msra.mxu0 0.0
    %96 = vmatprep.subr.mxu0 0.0
    %97 = vmatpush1.msra.mxu0 0.0
    %98 = vmatprep.subr.mxu0 0.0
    %99 = vmatpush1.msra.mxu0 0.0
    %100 = vmatprep.subr.mxu0 0.0
    %101 = vmatpush1.msra.mxu0 0.0
    %102 = vmatprep.subr.mxu0 0.0
    %103 = vmatpush1.msra.mxu0 0.0
    %104 = vmatprep.subr.mxu0 0.0
    %105 = vmatpush1.msra.mxu0 0.0
    %106 = vmatprep.subr.mxu0 0.0
    %107 = vmatpush1.msra.mxu0 0.0
    %108 = vmatprep.subr.mxu0 0.0
    %109 = vmatpush1.msra.mxu0 0.0
    %110 = vmatprep.subr.mxu0 0.0
    %111 = vmatpush1.msra.mxu0 0.0
    %112 = vmatprep.subr.mxu0 0.0
    %113 = vmatpush1.msra.mxu0 0.0
    %114 = vmatprep.subr.mxu0 0.0
    %115 = vmatpush1.msra.mxu0 0.0
    %116 = vmatprep.subr.mxu0 0.0
    %117 = vmatpush1.msra.mxu0 0.0
    %118 = vmatprep.subr.mxu0 0.0
    %119 = vmatpush1.msra.mxu0 0.0
    %120 = vmatprep.subr.mxu0 0.0
    %121 = vmatpush1.msra.mxu0 0.0
    %122 = vmatprep.subr.mxu0 0.0
    %123 = vmatpush1.msra.mxu0 0.0
    %124 = vmatprep.subr.mxu0 0.0
    %125 = vmatpush1.msra.mxu0 0.0
    %126 = vmatprep.subr.mxu0 0.0
    %127 = vmatpush1.msra.mxu0 0.0
    %128 = vmatprep.subr.mxu0 0.0
    %129 = vmatpush1.msra.mxu0 0.0
    %130 = vmatprep.subr.mxu0 0.0
    %131 = vmatpush1.msra.mxu0 0.0
    %132 = vmatprep.subr.mxu0 0.0
    %133 = vmatpush1.msra.mxu0 0.0
    %134 = vmatprep.subr.mxu0 0.0
    %135 = vmatpush1.msra.mxu0 0.0
    %136 = vmatprep.subr.mxu0 0.0
    %137 = vmatpush1.msra.mxu0 0.0
    %138 = vmatprep.subr.mxu0 0.0
    %139 = vmatpush1.msra.mxu0 0.0
    %140 = vmatprep.subr.mxu0 0.0
    %141 = vmatpush1.msra.mxu0 0.0
    %142 = vmatprep.subr.mxu0 0.0
    %143 = vmatpush1.msra.mxu0 0.0
    %144 = vmatprep.subr.mxu0 0.0
    %145 = vmatpush1.msra.mxu0 0.0
    %146 = vmatprep.mubr.f32.mxu0 0.0
    %147 = vmatmul.mubr.f32.gmra.mrb[0].mxu0 %v80
    %v148 = vpop.f32.mrb[0].mxu0
    %v149 = vadd.f32 %v77, %v148
    %v150 = vpop.f32.mrb[0].mxu0
    %151 = vdwg.mxu0
    %v152 = vmax.f32 %v149, 0.0
    %v153 = vlaneseq
    %v154 = vshrl.u32 %v153, 7
    %v155 = vsub.s32 1, %v154
    %v156 = vrot.slane %v73, %v155
    %157 = vmatprep.subr.mxu0 0.0
    %158 = vmatpush1.msra.mxu0 %v41
    %159 = vmatprep.subr.mxu0 0.0
    %160 = vmatpush1.msra.mxu0 %v42
    %161 = vmatprep.subr.mxu0 0.0
    %162 = vmatpush1.msra.mxu0 %v43
    %163 = vmatprep.subr.mxu0 0.0
    %164 = vmatpush1.msra.mxu0 %v44
    %165 = vmatprep.subr.mxu0 0.0
    %166 = vmatpush1.msra.mxu0 %v45
    %167 = vmatprep.subr.mxu0 0.0
    %168 = vmatpush1.msra.mxu0 %v46
    %169 = vmatprep.subr.mxu0 0.0
    %170 = vmatpush1.msra.mxu0 %v47
    %171 = vmatprep.subr.mxu0 0.0
    %172 = vmatpush1.msra.mxu0 %v48
    %173 = vmatprep.subr.mxu0 0.0
    %174 = vmatpush1.msra.mxu0 %v49
    %175 = vmatprep.subr.mxu0 0.0
    %176 = vmatpush1.msra.mxu0 %v50
    %177 = vmatprep.subr.mxu0 0.0
    %178 = vmatpush1.msra.mxu0 %v51
    %179 = vmatprep.subr.mxu0 0.0
    %180 = vmatpush1.msra.mxu0 %v52
    %181 = vmatprep.subr.mxu0 0.0
    %182 = vmatpush1.msra.mxu0 %v53
    %183 = vmatprep.subr.mxu0 0.0
    %184 = vmatpush1.msra.mxu0 %v54
    %185 = vmatprep.subr.mxu0 0.0
    %186 = vmatpush1.msra.mxu0 %v55
    %187 = vmatprep.subr.mxu0 0.0
    %188 = vmatpush1.msra.mxu0 %v56
    %189 = vmatprep.subr.mxu0 0.0
    %190 = vmatpush1.msra.mxu0 0.0
    %191 = vmatprep.subr.mxu0 0.0
    %192 = vmatpush1.msra.mxu0 0.0
    %193 = vmatprep.subr.mxu0 0.0
    %194 = vmatpush1.msra.mxu0 0.0
    %195 = vmatprep.subr.mxu0 0.0
    %196 = vmatpush1.msra.mxu0 0.0
    %197 = vmatprep.subr.mxu0 0.0
    %198 = vmatpush1.msra.mxu0 0.0
    %199 = vmatprep.subr.mxu0 0.0
    %200 = vmatpush1.msra.mxu0 0.0
    %201 = vmatprep.subr.mxu0 0.0
    %202 = vmatpush1.msra.mxu0 0.0
    %203 = vmatprep.subr.mxu0 0.0
    %204 = vmatpush1.msra.mxu0 0.0
    %205 = vmatprep.subr.mxu0 0.0
    %206 = vmatpush1.msra.mxu0 0.0
    %207 = vmatprep.subr.mxu0 0.0
    %208 = vmatpush1.msra.mxu0 0.0
    %209 = vmatprep.subr.mxu0 0.0
    %210 = vmatpush1.msra.mxu0 0.0
    %211 = vmatprep.subr.mxu0 0.0
    %212 = vmatpush1.msra.mxu0 0.0
    %213 = vmatprep.subr.mxu0 0.0
    %214 = vmatpush1.msra.mxu0 0.0
    %215 = vmatprep.subr.mxu0 0.0
    %216 = vmatpush1.msra.mxu0 0.0
    %217 = vmatprep.subr.mxu0 0.0
    %218 = vmatpush1.msra.mxu0 0.0
    %219 = vmatprep.subr.mxu0 0.0
    %220 = vmatpush1.msra.mxu0 0.0
    %221 = vmatprep.mubr.f32.mxu0 0.0
    %222 = vmatmul.mubr.f32.gmra.mrb[0].mxu0 %v152
    %v223 = vpop.f32.mrb[0].mxu0
    %v224 = vadd.f32 %v156, %v223
    %v225 = vpop.f32.mrb[0].mxu0
    %226 = vdwg.mxu0
    %v227 = vmax.f32 %v224, 0.0
    %v228 = vlaneseq
    %v229 = vshrl.u32 %v228, 7
    %v230 = vsub.s32 2, %v229
    %v231 = vrot.slane %v73, %v230
    %232 = vmatprep.subr.mxu0 0.0
    %233 = vmatpush1.msra.mxu0 %v57
    %234 = vmatprep.subr.mxu0 0.0
    %235 = vmatpush1.msra.mxu0 %v58
    %236 = vmatprep.subr.mxu0 0.0
    %237 = vmatpush1.msra.mxu0 %v59
    %238 = vmatprep.subr.mxu0 0.0
    %239 = vmatpush1.msra.mxu0 %v60
    %240 = vmatprep.subr.mxu0 0.0
    %241 = vmatpush1.msra.mxu0 %v61
    %242 = vmatprep.subr.mxu0 0.0
    %243 = vmatpush1.msra.mxu0 %v62
    %244 = vmatprep.subr.mxu0 0.0
    %245 = vmatpush1.msra.mxu0 %v63
    %246 = vmatprep.subr.mxu0 0.0
    %247 = vmatpush1.msra.mxu0 %v64
    %248 = vmatprep.subr.mxu0 0.0
    %249 = vmatpush1.msra.mxu0 %v65
    %250 = vmatprep.subr.mxu0 0.0
    %251 = vmatpush1.msra.mxu0 %v66
    %252 = vmatprep.subr.mxu0 0.0
    %253 = vmatpush1.msra.mxu0 %v67
    %254 = vmatprep.subr.mxu0 0.0
    %255 = vmatpush1.msra.mxu0 %v68
    %256 = vmatprep.subr.mxu0 0.0
    %257 = vmatpush1.msra.mxu0 %v69
    %258 = vmatprep.subr.mxu0 0.0
    %259 = vmatpush1.msra.mxu0 %v70
    %260 = vmatprep.subr.mxu0 0.0
    %261 = vmatpush1.msra.mxu0 %v71
    %262 = vmatprep.subr.mxu0 0.0
    %263 = vmatpush1.msra.mxu0 %v72
    %264 = vmatprep.subr.mxu0 0.0
    %265 = vmatpush1.msra.mxu0 0.0
    %266 = vmatprep.subr.mxu0 0.0
    %267 = vmatpush1.msra.mxu0 0.0
    %268 = vmatprep.subr.mxu0 0.0
    %269 = vmatpush1.msra.mxu0 0.0
    %270 = vmatprep.subr.mxu0 0.0
    %271 = vmatpush1.msra.mxu0 0.0
    %272 = vmatprep.subr.mxu0 0.0
    %273 = vmatpush1.msra.mxu0 0.0
    %274 = vmatprep.subr.mxu0 0.0
    %275 = vmatpush1.msra.mxu0 0.0
    %276 = vmatprep.subr.mxu0 0.0
    %277 = vmatpush1.msra.mxu0 0.0
    %278 = vmatprep.subr.mxu0 0.0
    %279 = vmatpush1.msra.mxu0 0.0
    %280 = vmatprep.subr.mxu0 0.0
    %281 = vmatpush1.msra.mxu0 0.0
    %282 = vmatprep.subr.mxu0 0.0
    %283 = vmatpush1.msra.mxu0 0.0
    %284 = vmatprep.subr.mxu0 0.0
    %285 = vmatpush1.msra.mxu0 0.0
    %286 = vmatprep.subr.mxu0 0.0
    %287 = vmatpush1.msra.mxu0 0.0
    %288 = vmatprep.subr.mxu0 0.0
    %289 = vmatpush1.msra.mxu0 0.0
    %290 = vmatprep.subr.mxu0 0.0
    %291 = vmatpush1.msra.mxu0 0.0
    %292 = vmatprep.subr.mxu0 0.0
    %293 = vmatpush1.msra.mxu0 0.0
    %294 = vmatprep.subr.mxu0 0.0
    %295 = vmatpush1.msra.mxu0 0.0
    %296 = vmatprep.mubr.f32.mxu0 0.0
    %297 = vmatmul.mubr.f32.gmra.mrb[0].mxu0 %v227
    %v298 = vpop.f32.mrb[0].mxu0
    %v299 = vadd.f32 %v231, %v298
    %v300 = vpop.f32.mrb[0].mxu0
    %301 = vdwg.mxu0
    %302 = vst [vmem:[#allocation7] sm:$0x3] %v299
    // Predicated region
    $region18: #{tpu_custom_call.1} parent=1 // pred_check
      _
    $region19: #{tpu_custom_call.1} parent=1 // pred_check_branch
      %304 = sbr.rel (0) target = $region21
    $region20: #{tpu_custom_call.1} parent=1 // pred_region
      %s306 = ssub.s32 32, 32
      %307 = vsyncadd [#allocation4], %s306
      %s309 = sshll.u32 [#allocation7], 4
      %s310 = int_to_ptr.vmem [resolvable:$true] %s309
      %312 = dma.vmem_to_hbm [thread:$0]  %s310, 32, %s2, [#allocation4]
    $region21: #{tpu_custom_call.1} parent=1 // pred_fallthru
      _
    // Predicated region
    $region22: #{tpu_custom_call.1} parent=1 // pred_check
      _
    $region23: #{tpu_custom_call.1} parent=1 // pred_check_branch
      %314 = sbr.rel (0) target = $region25
    $region24: #{tpu_custom_call.1} parent=1 // pred_region
      %315 = dma.done [#allocation4], 32
    $region25: #{tpu_custom_call.1} parent=1 // pred_fallthru
      _
    %316 = vsyncpa [#allocation3], 1
    %317 = vsyncpa [#allocation6], 1
    %318 = vsyncpa [#allocation4], 1

</llo_original>
